<compile_context>
chip_gen: v5e
topology: v5e:2x2
jax: 0.10.0
libtpu: 0.0.40
codegen_flags: <defaults>
</compile_context>

<pallas_src>
import math
import functools

import jax
import jax.numpy as jnp
from jax.experimental import pallas as pl
from jax.experimental.pallas import tpu as pltpu


def make_pe(d_model: int, max_len: int = 5000) -> jnp.ndarray:
    """Positional-encoding table, identical math to the PyTorch __init__ (float32)."""
    position = jnp.arange(0, max_len, dtype=jnp.float32)[:, None]             # (max_len, 1)
    div_term = jnp.exp(jnp.arange(0, d_model, 2, dtype=jnp.float32)
                       * (-math.log(10000.0) / d_model))                      # (ceil(d/2),)
    pe = jnp.zeros((max_len, d_model), dtype=jnp.float32)
    pe = pe.at[:, 0::2].set(jnp.sin(position * div_term))
    pe = pe.at[:, 1::2].set(jnp.cos(position * div_term[: d_model // 2]))
    return pe                                                                 # (max_len, d_model)


def _default_tile_bytes() -> int:
    """Generation-aware x-tile budget: ~4 MiB on v7x (small VMEM, fast HBM),
    2 MiB baseline elsewhere (safe inside v5e's 16 MiB default scoped VMEM)."""
    try:
        info = pltpu.get_tpu_info()
        vmem = getattr(info, "vmem_capacity_bytes", None)
        if vmem is not None and vmem <= 64 * 1024 * 1024:   # v7x-class TensorCore
            return 4 * 1024 * 1024
    except Exception:
        pass
    return 2 * 1024 * 1024


def _add_pe_kernel(x_ref, pe_ref, o_ref, *, reps: int):
    # x_ref / o_ref: (ts, reps * W) lane-dense slab tile; pe_ref: (ts, W), x.dtype.
    pe_blk = pe_ref[...]
    if reps == 1:
        o_ref[...] = (x_ref[...] + pe_blk).astype(o_ref.dtype)
    else:
        # Static, unrolled per-block slice adds: ref slices are free views and,
        # because W % 128 == 0 on this path, every load/store is lane-aligned.
        w = pe_blk.shape[-1]
        for b in range(reps):
            sl = slice(b * w, (b + 1) * w)
            o_ref[:, sl] = (x_ref[:, sl] + pe_blk).astype(o_ref.dtype)


def positional_encoding_forward(x: jnp.ndarray, pe: jnp.ndarray,
                                *, target_tile_bytes: int | None = None,
                                donate_x: bool = False) -> jnp.ndarray:
    """x: [seq_len, batch, d_model]; pe: [max_len, d_model] -> x + pe[:seq_len]."""
    S, B, D = x.shape
    if S > pe.shape[0]:
        raise ValueError(f"seq_len={S} exceeds positional-encoding max_len={pe.shape[0]}")
    if target_tile_bytes is None:
        target_tile_bytes = _default_tile_bytes()

    itemsize = jnp.dtype(x.dtype).itemsize
    sub_min = {4: 8, 2: 16, 1: 32}.get(itemsize, 8)       # dtype-native sublane multiple

    # Cast once in the wrapper (halves pe HBM traffic for bf16) and slice to used rows.
    pe_s = pe[:S].astype(x.dtype)                          # (S, D)

    # Replicate pe to a lane-aligned period so its DMA and the in-kernel broadcast
    # are 128-lane dense.  r*D == lcm(D, 128), so extra pe traffic is negligible.
    r = 128 // math.gcd(D, 128)
    if B % r == 0:
        f = r
    else:
        # TODO(synk): pad B to a multiple of r instead of fully replicating pe when
        # B is large and not divisible by r (rare shape; full replication is correct).
        f = B
    pe_r = jnp.tile(pe_s, (1, f)) if f > 1 else pe_s       # (S, W)
    W = f * D
    nblocks = B // f                                       # replication blocks across batch

    # Lane-dense 2-D slab view of x (contiguous reshape).
    BD = B * D
    x2 = x.reshape(S, BD)

    # ---- Lane-axis tiling: g whole replication blocks per tile, capped by budget ----
    max_g = target_tile_bytes // max(1, sub_min * W * itemsize)
    if max_g >= nblocks:
        g = nblocks
    else:
        g = 1
        for cand in range(min(max(1, max_g), nblocks), 0, -1):
            if nblocks % cand == 0:
                g = cand
                break
    lane_w = g * W                                         # multiple of 128, or == BD
    lane_steps = nblocks // g

    # ---- Row-axis tiling: fill the byte budget, sublane-multiple rows ----
    rows = (target_tile_bytes // max(1, lane_w * itemsize)) // sub_min * sub_min
    rows = max(sub_min, rows)
    ts = S if rows >= S else rows
    # Give a 1-step grid at least 2 row steps so v7x's two TensorCores both work.
    if ts >= S and lane_steps == 1 and S >= 2 * sub_min:
        ts = max(sub_min, (S // 2) // sub_min * sub_min)
    row_steps = pl.cdiv(S, ts)

    flops = S * BD
    bytes_accessed = 2 * S * BD * itemsize + S * W * itemsize * lane_steps

    # Only raise the scoped-VMEM limit if the double-buffered working set needs it.
    vmem_need = 2 * (2 * ts * lane_w + ts * W) * itemsize
    cp_kwargs = dict(dimension_semantics=("parallel", "parallel"))
    if vmem_need > 12 * 1024 * 1024:
        cp_kwargs["vmem_limit_bytes"] = min(2 * vmem_need, 48 * 1024 * 1024)

    out2 = pl.pallas_call(
        functools.partial(_add_pe_kernel, reps=g),
        out_shape=jax.ShapeDtypeStruct((S, BD), x.dtype),
        grid=(row_steps, lane_steps),
        in_specs=[
            pl.BlockSpec((ts, lane_w), lambda i, j: (i, j)),   # x slab tile
            pl.BlockSpec((ts, W), lambda i, j: (i, 0)),        # pe rows (lane axis ignored)
        ],
        out_specs=pl.BlockSpec((ts, lane_w), lambda i, j: (i, j)),
        compiler_params=pltpu.CompilerParams(**cp_kwargs),
        cost_estimate=pl.CostEstimate(flops=flops, transcendentals=0,
                                      bytes_accessed=bytes_accessed),
        input_output_aliases=({0: 0} if donate_x else {}),
    )(x2, pe_r)
    return out2.reshape(S, B, D)


if __name__ == "__main__":
    # Small shapes consistent with the module's forward: [seq_len, batch, d_model]
    seq_len, batch, d_model = 8, 2, 32
    max_len = 64  # semantics identical to max_len=5000 for seq_len <= 64

    key = jax.random.PRNGKey(0)
    x = jax.random.normal(key, (seq_len, batch, d_model), dtype=jnp.float32)

    pe = make_pe(d_model, max_len)

    out = positional_encoding_forward(x, pe)
    out = jax.block_until_ready(out)

    # Pure-JAX reference (same math as the PyTorch forward).
    ref = x + pe[:seq_len][:, None, :]
    assert out.shape == (seq_len, batch, d_model)
    assert jnp.allclose(out, ref, atol=1e-6), "mismatch vs reference"

    print("KERNEL_OK")
</pallas_src>

<mosaic_0001>
module attributes {stable_mosaic.version = 11 : i64} {
  func.func @_add_pe_kernel(%arg0: i32, %arg1: i32, %arg2: memref<8x64xf32, #tpu.memory_space<vmem>>, %arg3: memref<8x64xf32, #tpu.memory_space<vmem>>, %arg4: memref<8x64xf32, #tpu.memory_space<vmem>>) attributes {dimension_semantics = [#tpu.dimension_semantics<parallel>, #tpu.dimension_semantics<parallel>], iteration_bounds = array<i64: 1, 1>, scalar_prefetch = 0 : i64, scratch_operands = 0 : i64, tpu.core_type = #tpu.core_type<tc>, window_params = [{transform_indices = @transform_0, window_bounds = array<i64: 8, 64>}, {transform_indices = @transform_1, window_bounds = array<i64: 8, 64>}, {transform_indices = @transform_2, window_bounds = array<i64: 8, 64>}]} {
    %c0 = arith.constant 0 : index
    %c0_0 = arith.constant 0 : index
    %0 = vector.load %arg3[%c0, %c0_0] : memref<8x64xf32, #tpu.memory_space<vmem>>, vector<8x64xf32>
    %c0_1 = arith.constant 0 : index
    %c0_2 = arith.constant 0 : index
    %1 = vector.load %arg2[%c0_1, %c0_2] : memref<8x64xf32, #tpu.memory_space<vmem>>, vector<8x64xf32>
    %2 = arith.addf %1, %0 : vector<8x64xf32>
    %c0_3 = arith.constant 0 : index
    %c0_4 = arith.constant 0 : index
    %3 = vector.load %arg4[%c0_3, %c0_4] : memref<8x64xf32, #tpu.memory_space<vmem>>, vector<8x64xf32>
    tpu.vector_store %arg4[%c0_3, %c0_4], %2 {strides = array<i32>} : memref<8x64xf32, #tpu.memory_space<vmem>>, vector<8x64xf32>,
    return
  }
  func.func @transform_0(%arg0: i32, %arg1: i32) -> (i32, i32) {
    %c0_i32 = arith.constant 0 : i32
    return %arg0, %arg1 : i32, i32
  }
  func.func @transform_1(%arg0: i32, %arg1: i32) -> (i32, i32) {
    %c0_i32 = arith.constant 0 : i32
    %c0_i32_0 = arith.constant 0 : i32
    return %arg0, %c0_i32 : i32, i32
  }
  func.func @transform_2(%arg0: i32, %arg1: i32) -> (i32, i32) {
    %c0_i32 = arith.constant 0 : i32
    return %arg0, %arg1 : i32, i32
  }
}

</mosaic_0001>

<llo_original>
// kernel: tpu_custom_call.1
$region0: #{tpu_custom_call.1}
  #allocation0 [shape = 'u32[]', space=smem, size = 0x4, offset = 0x4, fixed_abs, tag = 'smem constant byte address 0x4 - core index']
  #allocation1 [shape = 'u32[72,128]{1,0:T(1,128)}', space=vmem, size = 0x9000, scoped, tag = 'internal scratch']
  %s0 = inlined_call_operand.hbm [shape: f32[8,64], index: 0, kind: input, shape index: {}]
  %s1 = inlined_call_operand.hbm [shape: f32[8,64], index: 1, kind: input, shape index: {}]
  %s2 = inlined_call_operand.hbm [shape: f32[8,64], index: 2, kind: output, shape index: {}]
  %s3 = sld [smem:[#allocation0]]
  $region26: #{tpu_custom_call.1} parent=0
    _
  %s5 = ssub.s32 1, %s3
  %s6 = scalar_select 0, %s5, %s3
  $region1: #{tpu_custom_call.1} parent=0
    #allocation2 [shape = 'u8[4096]{0}', space=vmem, size = 0x1000, scoped, tag = 'input window, operand 0, single buffered']
    #allocation3 [shape = 's32[1]{0}', space=sflag, size = 0x4, scoped, tag = 'scoped memory for tpu_custom_call.1']
    #allocation4 [shape = 's32[1]{0}', space=sflag, size = 0x4, scoped, tag = 'scoped memory for tpu_custom_call.1']
    #allocation5 [shape = 'u8[4096]{0}', space=vmem, size = 0x1000, scoped, tag = 'input window, operand 1, single buffered']
    #allocation6 [shape = 's32[1]{0}', space=sflag, size = 0x4, scoped, tag = 'scoped memory for tpu_custom_call.1']
    #allocation7 [shape = 'u8[4096]{0}', space=vmem, size = 0x1000, scoped, tag = 'output window, operand 0, single buffered']
    %7 = vsyncpa [#allocation3], 0
    %8 = vsyncpa [#allocation6], 0
    %9 = vsyncpa [#allocation4], 0
    // Predicated region
    $region2: #{tpu_custom_call.1} parent=1 // pred_check
      _
    $region3: #{tpu_custom_call.1} parent=1 // pred_check_branch
      %11 = sbr.rel (0) target = $region5
    $region4: #{tpu_custom_call.1} parent=1 // pred_region
      %13 = vsyncadd [#allocation3], 0
      %s15 = sshll.u32 %s0, 4
      %s16 = int_to_ptr.hbm [resolvable:$true] %s15
      %s17 = sshll.u32 [#allocation2], 4
      %s18 = int_to_ptr.vmem [resolvable:$true] %s17
      %20 = dma.hbm_to_vmem [thread:$0]  %s16, 128, %s18, [#allocation3]
    $region5: #{tpu_custom_call.1} parent=1 // pred_fallthru
      _
    // Predicated region
    $region6: #{tpu_custom_call.1} parent=1 // pred_check
      _
    $region7: #{tpu_custom_call.1} parent=1 // pred_check_branch
      %22 = sbr.rel (0) target = $region9
    $region8: #{tpu_custom_call.1} parent=1 // pred_region
      %24 = vsyncadd [#allocation6], 0
      %s26 = sshll.u32 %s1, 4
      %s27 = int_to_ptr.hbm [resolvable:$true] %s26
      %s28 = sshll.u32 [#allocation5], 4
      %s29 = int_to_ptr.vmem [resolvable:$true] %s28
      %31 = dma.hbm_to_vmem [thread:$0]  %s27, 128, %s29, [#allocation6]
    $region9: #{tpu_custom_call.1} parent=1 // pred_fallthru
      _
    // Predicated region
    $region10: #{tpu_custom_call.1} parent=1 // pred_check
      _
    $region11: #{tpu_custom_call.1} parent=1 // pred_check_branch
      %33 = sbr.rel (0) target = $region13
    $region12: #{tpu_custom_call.1} parent=1 // pred_region
      %35 = dma.done [#allocation3], 128
    $region13: #{tpu_custom_call.1} parent=1 // pred_fallthru
      _
    // Predicated region
    $region14: #{tpu_custom_call.1} parent=1 // pred_check
      _
    $region15: #{tpu_custom_call.1} parent=1 // pred_check_branch
      %37 = sbr.rel (0) target = $region17
    $region16: #{tpu_custom_call.1} parent=1 // pred_region
      %39 = dma.done [#allocation6], 128
    $region17: #{tpu_custom_call.1} parent=1 // pred_fallthru
      _
    %v40 = vld [vmem:[#allocation5] sm:$0xff]
    %v41 = vld [vmem:[#allocation2] sm:$0xff]
    %v42 = vadd.f32 %v41, %v40
    %vm43 = vcmask 523264
    %44 = vst.msk [vmem:[#allocation7] sm:$0xff] %vm43, %v42
    // Predicated region
    $region18: #{tpu_custom_call.1} parent=1 // pred_check
      _
    $region19: #{tpu_custom_call.1} parent=1 // pred_check_branch
      %46 = sbr.rel (0) target = $region21
    $region20: #{tpu_custom_call.1} parent=1 // pred_region
      %48 = vsyncadd [#allocation4], 0
      %s50 = sshll.u32 [#allocation7], 4
      %s51 = int_to_ptr.vmem [resolvable:$true] %s50
      %s52 = sshll.u32 %s2, 4
      %s53 = int_to_ptr.hbm [resolvable:$true] %s52
      %55 = dma.vmem_to_hbm [thread:$0]  %s51, 128, %s53, [#allocation4]
    $region21: #{tpu_custom_call.1} parent=1 // pred_fallthru
      _
    // Predicated region
    $region22: #{tpu_custom_call.1} parent=1 // pred_check
      _
    $region23: #{tpu_custom_call.1} parent=1 // pred_check_branch
      %57 = sbr.rel (0) target = $region25
    $region24: #{tpu_custom_call.1} parent=1 // pred_region
      %59 = dma.done [#allocation4], 128
    $region25: #{tpu_custom_call.1} parent=1 // pred_fallthru
      _
    %60 = vsyncpa [#allocation3], 1
    %61 = vsyncpa [#allocation6], 1
    %62 = vsyncpa [#allocation4], 1

</llo_original>
